<compile_context>
chip_gen: v7x
topology: tpu7x:2x2x1
jax: 0.10.0
libtpu: 0.0.40
codegen_flags: <defaults>
</compile_context>

<pallas_src>
import math
import functools

import jax
import jax.numpy as jnp
from jax.experimental import pallas as pl
from jax.experimental.pallas import tpu as pltpu


# -----------------------------------------------------------------------------
# Kernels
# -----------------------------------------------------------------------------
def gru_cell_kernel(x_ref, h_ref, wx_ref, wh_ref, whh_ref, b_ref, out_ref,
                    *, hidden):
    """Single GRU step. All refs are 2-D VMEM tiles (batch x features)."""
    x = x_ref[...]            # (B, I)
    h = h_ref[...]            # (B, H)

    # Fused pre-activation slab: [ r_pre | z_pre | x@whx + bh ]  -> (B, 3H)
    pre = (jnp.dot(x, wx_ref[...], preferred_element_type=jnp.float32)
           + jnp.dot(h, wh_ref[...], preferred_element_type=jnp.float32)
           + b_ref[...])

    rz = jax.nn.sigmoid(pre[:, :2 * hidden])   # one EUP pass over (B, 2H)
    r = rz[:, :hidden]
    z = rz[:, hidden:]

    g = jnp.tanh(
        jnp.dot(r * h, whh_ref[...], preferred_element_type=jnp.float32)
        + pre[:, 2 * hidden:])

    out_ref[...] = (1.0 - z) * h + z * g


def gru_seq_kernel(x_ref, h0_ref, wx_ref, wh_ref, whh_ref, b_ref, out_ref,
                   h_scratch, *, hidden):
    """Full sequence: grid axis 0 is time, h carried in VMEM scratch."""
    t = pl.program_id(0)

    @pl.when(t == 0)
    def _():
        h_scratch[...] = h0_ref[...]

    x = x_ref[0]              # (B, I)  -- squeeze the size-1 time block
    h = h_scratch[...]        # (B, H)

    pre = (jnp.dot(x, wx_ref[...], preferred_element_type=jnp.float32)
           + jnp.dot(h, wh_ref[...], preferred_element_type=jnp.float32)
           + b_ref[...])

    rz = jax.nn.sigmoid(pre[:, :2 * hidden])
    r = rz[:, :hidden]
    z = rz[:, hidden:]

    g = jnp.tanh(
        jnp.dot(r * h, whh_ref[...], preferred_element_type=jnp.float32)
        + pre[:, 2 * hidden:])

    h_new = (1.0 - z) * h + z * g
    h_scratch[...] = h_new
    out_ref[0] = h_new


# -----------------------------------------------------------------------------
# Parameter preparation (done once, not per call)
# -----------------------------------------------------------------------------
def prepare_fused_params(params, input_size):
    """Fuse gate weights/biases once so the hot path passes only 4 tensors."""
    I = input_size
    H = params["wr"].shape[1]
    dt = params["wr"].dtype

    wr_x, wr_h = params["wr"][:I], params["wr"][I:]
    wz_x, wz_h = params["wz"][:I], params["wz"][I:]

    wx = jnp.concatenate([wr_x, wz_x, params["whx"]], axis=1)          # (I, 3H)
    wh = jnp.concatenate([wr_h, wz_h, jnp.zeros((H, H), dt)], axis=1)  # (H, 3H)
    bias = jnp.concatenate(
        [params["br"], params["bz"], params["bh"]]).reshape(1, 3 * H)  # (1, 3H)

    return {"wx": wx, "wh": wh, "whh": params["whh"], "b": bias,
            "input_size": I, "hidden_size": H}


# -----------------------------------------------------------------------------
# Wrappers
# -----------------------------------------------------------------------------
def gru_cell_pallas(x, h_prev, fused):
    """x: (B, 1, I), h_prev: (B, 1, H) or None -> (B, 1, H)."""
    B, one, I = x.shape
    assert one == 1 and I == fused["input_size"]
    H = fused["hidden_size"]
    if h_prev is None:
        h_prev = jnp.zeros((B, 1, H), dtype=x.dtype)

    x2 = x.reshape(B, I).astype(jnp.float32)
    h2 = h_prev.reshape(B, H).astype(jnp.float32)

    inputs = (x2, h2, fused["wx"], fused["wh"], fused["whh"], fused["b"])

    vmem_spec = pl.BlockSpec(memory_space=pltpu.MemorySpace.VMEM)
    out = pl.pallas_call(
        functools.partial(gru_cell_kernel, hidden=H),
        out_shape=jax.ShapeDtypeStruct((B, H), jnp.float32),
        in_specs=[vmem_spec] * len(inputs),
        out_specs=vmem_spec,
    )(*inputs)

    return out.reshape(B, 1, H)


def gru_sequence_pallas(xs, h0, fused):
    """Step the GRU over a whole sequence inside one pallas_call.

    xs: (T, B, I), h0: (B, H) -> hidden states for every step, (T, B, H).
    Weights are DMA'd once (index_map constant over t) and stay VMEM-resident;
    h is carried across grid steps in a VMEM scratch accumulator.
    """
    T, B, I = xs.shape
    assert I == fused["input_size"]
    H = fused["hidden_size"]

    xs = xs.astype(jnp.float32)
    h0 = h0.astype(jnp.float32)

    grid_spec = pltpu.PrefetchScalarGridSpec(
        num_scalar_prefetch=0,
        grid=(T,),
        in_specs=[
            pl.BlockSpec((1, B, I), lambda t: (t, 0, 0)),      # x_t streamed
            pl.BlockSpec((B, H), lambda t: (0, 0)),            # h0 (resident)
            pl.BlockSpec((I, 3 * H), lambda t: (0, 0)),        # Wx (resident)
            pl.BlockSpec((H, 3 * H), lambda t: (0, 0)),        # Wh (resident)
            pl.BlockSpec((H, H), lambda t: (0, 0)),            # whh (resident)
            pl.BlockSpec((1, 3 * H), lambda t: (0, 0)),        # bias (resident)
        ],
        out_specs=pl.BlockSpec((1, B, H), lambda t: (t, 0, 0)),
        scratch_shapes=[pltpu.VMEM((B, H), jnp.float32)],      # h carry
    )

    out = pl.pallas_call(
        functools.partial(gru_seq_kernel, hidden=H),
        out_shape=jax.ShapeDtypeStruct((T, B, H), jnp.float32),
        grid_spec=grid_spec,
        compiler_params=pltpu.CompilerParams(
            dimension_semantics=("arbitrary",)),
    )(xs, h0, fused["wx"], fused["wh"], fused["whh"], fused["b"])

    return out


# -----------------------------------------------------------------------------
# Init + pure-JAX reference (matches the PyTorch forward exactly)
# -----------------------------------------------------------------------------
def xavier_uniform(key, shape, dtype=jnp.float32):
    fan_in, fan_out = shape
    bound = math.sqrt(6.0 / (fan_in + fan_out))
    return jax.random.uniform(key, shape, dtype, minval=-bound, maxval=bound)


def init_params(key, input_size, hidden_size):
    concat_len = input_size + hidden_size
    k1, k2, k3, k4 = jax.random.split(key, 4)
    return {
        "wr": xavier_uniform(k1, (concat_len, hidden_size)),
        "wz": xavier_uniform(k2, (concat_len, hidden_size)),
        "whh": xavier_uniform(k3, (hidden_size, hidden_size)),
        "whx": xavier_uniform(k4, (input_size, hidden_size)),
        "br": jnp.zeros((hidden_size,), jnp.float32),
        "bz": jnp.zeros((hidden_size,), jnp.float32),
        "bh": jnp.zeros((hidden_size,), jnp.float32),
    }


def gru_cell_ref(x, h_prev, params):
    B, _, I = x.shape
    H = params["wr"].shape[1]
    if h_prev is None:
        h_prev = jnp.zeros((B, 1, H), dtype=x.dtype)
    xc = jnp.concatenate([x, h_prev], axis=2)
    r = jax.nn.sigmoid(jnp.matmul(xc, params["wr"]) + params["br"])
    z = jax.nn.sigmoid(jnp.matmul(xc, params["wz"]) + params["bz"])
    g = jnp.tanh(jnp.matmul(r * h_prev, params["whh"])
                 + jnp.matmul(x, params["whx"]) + params["bh"])
    return (1.0 - z) * h_prev + z * g


# -----------------------------------------------------------------------------
if __name__ == "__main__":
    # The PyTorch module hard-codes batch=64 via self.h = zeros(64, 1, hidden).
    batch, input_size, hidden_size, seq_len = 64, 16, 32, 8

    key = jax.random.PRNGKey(0)
    kx, kh, kp, ks = jax.random.split(key, 4)

    params = init_params(kp, input_size, hidden_size)
    fused = prepare_fused_params(params, input_size)   # done once, off hot path

    x = jax.random.normal(kx, (batch, 1, input_size), dtype=jnp.float32)
    h_prev = jax.random.normal(kh, (batch, 1, hidden_size), dtype=jnp.float32)

    # --- single-step kernel (with explicit h_prev and with default zeros) ---
    out = jax.block_until_ready(gru_cell_pallas(x, h_prev, fused))
    out0 = jax.block_until_ready(gru_cell_pallas(x, None, fused))

    ref = gru_cell_ref(x, h_prev, params)
    ref0 = gru_cell_ref(x, None, params)
    assert out.shape == (batch, 1, hidden_size)
    assert jnp.allclose(out, ref, atol=1e-5, rtol=1e-5)
    assert jnp.allclose(out0, ref0, atol=1e-5, rtol=1e-5)

    # --- whole-sequence kernel (time loop inside one pallas_call) ---
    xs = jax.random.normal(ks, (seq_len, batch, input_size), dtype=jnp.float32)
    h0 = jnp.zeros((batch, hidden_size), jnp.float32)
    hs = jax.block_until_ready(gru_sequence_pallas(xs, h0, fused))

    def ref_step(h, xt):
        h_new = gru_cell_ref(xt[:, None, :], h[:, None, :], params)[:, 0, :]
        return h_new, h_new

    _, hs_ref = jax.lax.scan(ref_step, h0, xs)
    assert hs.shape == (seq_len, batch, hidden_size)
    assert jnp.allclose(hs, hs_ref, atol=1e-5, rtol=1e-5)

    # TODO(synk): optional bf16 matmul operands on v6e/v7x (keep f32 accumulate)
    # would halve weight DMA bytes but loosens the 1e-5 tolerance; left in f32
    # so the same script is exact on v5e as well.

    print("KERNEL_OK")
</pallas_src>

<mosaic_0001>
module attributes {stable_mosaic.version = 11 : i64} {
  func.func @gru_cell_kernel(%arg0: memref<64x16xf32, #tpu.memory_space<vmem>>, %arg1: memref<64x32xf32, #tpu.memory_space<vmem>>, %arg2: memref<16x96xf32, #tpu.memory_space<vmem>>, %arg3: memref<32x96xf32, #tpu.memory_space<vmem>>, %arg4: memref<32x32xf32, #tpu.memory_space<vmem>>, %arg5: memref<1x96xf32, #tpu.memory_space<vmem>>, %arg6: memref<64x32xf32, #tpu.memory_space<vmem>>) attributes {dimension_semantics = [], scalar_prefetch = 0 : i64, scratch_operands = 0 : i64, tpu.core_type = #tpu.core_type<tc>} {
    %c0 = arith.constant 0 : index
    %c0_0 = arith.constant 0 : index
    %0 = vector.load %arg0[%c0, %c0_0] : memref<64x16xf32, #tpu.memory_space<vmem>>, vector<64x16xf32>
    %c0_1 = arith.constant 0 : index
    %c0_2 = arith.constant 0 : index
    %1 = vector.load %arg1[%c0_1, %c0_2] : memref<64x32xf32, #tpu.memory_space<vmem>>, vector<64x32xf32>
    %c0_3 = arith.constant 0 : index
    %c0_4 = arith.constant 0 : index
    %2 = vector.load %arg2[%c0_3, %c0_4] : memref<16x96xf32, #tpu.memory_space<vmem>>, vector<16x96xf32>
    %cst = arith.constant dense<0.000000e+00> : vector<64x96xf32>
    %3 = tpu.matmul %0, %2, %cst {dimension_numbers = #tpu.dot_dimension_numbers<[1], [0], [0], [1], [0, 0, 1, 1], [], []>} : vector<64x16xf32>, vector<16x96xf32>, vector<64x96xf32> -> vector<64x96xf32>
    %c0_5 = arith.constant 0 : index
    %c0_6 = arith.constant 0 : index
    %4 = vector.load %arg3[%c0_5, %c0_6] : memref<32x96xf32, #tpu.memory_space<vmem>>, vector<32x96xf32>
    %cst_7 = arith.constant dense<0.000000e+00> : vector<64x96xf32>
    %5 = tpu.matmul %1, %4, %cst_7 {dimension_numbers = #tpu.dot_dimension_numbers<[1], [0], [0], [1], [0, 0, 1, 1], [], []>} : vector<64x32xf32>, vector<32x96xf32>, vector<64x96xf32> -> vector<64x96xf32>
    %6 = arith.addf %3, %5 : vector<64x96xf32>
    %c0_8 = arith.constant 0 : index
    %c0_9 = arith.constant 0 : index
    %7 = vector.load %arg5[%c0_8, %c0_9] : memref<1x96xf32, #tpu.memory_space<vmem>>, vector<1x96xf32>
    %8 = vector.broadcast %7 : vector<1x96xf32> to vector<64x96xf32>
    %9 = arith.addf %6, %8 : vector<64x96xf32>
    %10 = vector.extract_strided_slice %9 {offsets = [0, 0], sizes = [64, 64], strides = [1, 1]} : vector<64x96xf32> to vector<64x64xf32>
    %11 = arith.negf %10 : vector<64x64xf32>
    %12 = math.exp %11 : vector<64x64xf32>
    %cst_10 = arith.constant 1.000000e+00 : f32
    %13 = vector.broadcast %cst_10 : f32 to vector<64x64xf32>
    %14 = arith.addf %13, %12 : vector<64x64xf32>
    %15 = arith.divf %13, %14 : vector<64x64xf32>
    %16 = vector.extract_strided_slice %15 {offsets = [0, 0], sizes = [64, 32], strides = [1, 1]} : vector<64x64xf32> to vector<64x32xf32>
    %17 = vector.extract_strided_slice %15 {offsets = [0, 32], sizes = [64, 32], strides = [1, 1]} : vector<64x64xf32> to vector<64x32xf32>
    %18 = arith.mulf %16, %1 : vector<64x32xf32>
    %c0_11 = arith.constant 0 : index
    %c0_12 = arith.constant 0 : index
    %19 = vector.load %arg4[%c0_11, %c0_12] : memref<32x32xf32, #tpu.memory_space<vmem>>, vector<32x32xf32>
    %cst_13 = arith.constant dense<0.000000e+00> : vector<64x32xf32>
    %20 = tpu.matmul %18, %19, %cst_13 {dimension_numbers = #tpu.dot_dimension_numbers<[1], [0], [0], [1], [0, 0, 1, 1], [], []>} : vector<64x32xf32>, vector<32x32xf32>, vector<64x32xf32> -> vector<64x32xf32>
    %21 = vector.extract_strided_slice %9 {offsets = [0, 64], sizes = [64, 32], strides = [1, 1]} : vector<64x96xf32> to vector<64x32xf32>
    %22 = arith.addf %20, %21 : vector<64x32xf32>
    %23 = math.tanh %22 : vector<64x32xf32>
    %cst_14 = arith.constant 1.000000e+00 : f32
    %24 = vector.broadcast %cst_14 : f32 to vector<64x32xf32>
    %25 = arith.subf %24, %17 : vector<64x32xf32>
    %26 = arith.mulf %25, %1 : vector<64x32xf32>
    %27 = arith.mulf %17, %23 : vector<64x32xf32>
    %28 = arith.addf %26, %27 : vector<64x32xf32>
    %c0_15 = arith.constant 0 : index
    %c0_16 = arith.constant 0 : index
    %29 = vector.load %arg6[%c0_15, %c0_16] : memref<64x32xf32, #tpu.memory_space<vmem>>, vector<64x32xf32>
    tpu.vector_store %arg6[%c0_15, %c0_16], %28 {strides = array<i32>} : memref<64x32xf32, #tpu.memory_space<vmem>>, vector<64x32xf32>,
    return
  }
}

</mosaic_0001>

<llo_original>
// kernel: tpu_custom_call.1
$region0: #{tpu_custom_call.1}
  #allocation0 [shape = 'u32[]', space=smem, size = 0x4, offset = 0x4, fixed_abs, tag = 'smem constant byte address 0x4 - core index']
  #allocation1 [shape = 'u32[144,128]{1,0:T(1,128)}', space=vmem, size = 0x12000, scoped, tag = 'internal scratch']
  %s0 = inlined_call_operand.vmem [shape: f32[64,16], index: 0, kind: input, shape index: {}]
  %s1 = inlined_call_operand.vmem [shape: f32[64,32], index: 1, kind: input, shape index: {}]
  %s2 = inlined_call_operand.vmem [shape: f32[16,96], index: 2, kind: input, shape index: {}]
  %s3 = inlined_call_operand.vmem [shape: f32[32,96], index: 3, kind: input, shape index: {}]
  %s4 = inlined_call_operand.vmem [shape: f32[32,32], index: 4, kind: input, shape index: {}]
  %s5 = inlined_call_operand.vmem [shape: f32[1,96], index: 5, kind: input, shape index: {}]
  %s6 = inlined_call_operand.vmem [shape: f32[64,32], index: 6, kind: output, shape index: {}]
  %s7 = sld [smem:[#allocation0]]
  $region34: #{tpu_custom_call.1} parent=0
    _
  %s9 = ssub.s32 1, %s7
  %s10 = scalar_select 0, %s9, %s7
  // Predicated region
  $region2: #{tpu_custom_call.1} parent=0 // pred_check
    _
  $region3: #{tpu_custom_call.1} parent=0 // pred_check_branch
    %12 = sbr.rel (0) target = $region5
  $region4: #{tpu_custom_call.1} parent=0 // pred_region
    _
  $region5: #{tpu_custom_call.1} parent=0 // pred_fallthru
    _
  // Predicated region
  $region6: #{tpu_custom_call.1} parent=0 // pred_check
    _
  $region7: #{tpu_custom_call.1} parent=0 // pred_check_branch
    %14 = sbr.rel (0) target = $region9
  $region8: #{tpu_custom_call.1} parent=0 // pred_region
    _
  $region9: #{tpu_custom_call.1} parent=0 // pred_fallthru
    _
  // Predicated region
  $region10: #{tpu_custom_call.1} parent=0 // pred_check
    _
  $region11: #{tpu_custom_call.1} parent=0 // pred_check_branch
    %16 = sbr.rel (0) target = $region13
  $region12: #{tpu_custom_call.1} parent=0 // pred_region
    _
  $region13: #{tpu_custom_call.1} parent=0 // pred_fallthru
    _
  // Predicated region
  $region14: #{tpu_custom_call.1} parent=0 // pred_check
    _
  $region15: #{tpu_custom_call.1} parent=0 // pred_check_branch
    %18 = sbr.rel (0) target = $region17
  $region16: #{tpu_custom_call.1} parent=0 // pred_region
    _
  $region17: #{tpu_custom_call.1} parent=0 // pred_fallthru
    _
  // Predicated region
  $region18: #{tpu_custom_call.1} parent=0 // pred_check
    _
  $region19: #{tpu_custom_call.1} parent=0 // pred_check_branch
    %20 = sbr.rel (0) target = $region21
  $region20: #{tpu_custom_call.1} parent=0 // pred_region
    _
  $region21: #{tpu_custom_call.1} parent=0 // pred_fallthru
    _
  // Predicated region
  $region22: #{tpu_custom_call.1} parent=0 // pred_check
    _
  $region23: #{tpu_custom_call.1} parent=0 // pred_check_branch
    %22 = sbr.rel (0) target = $region25
  $region24: #{tpu_custom_call.1} parent=0 // pred_region
    _
  $region25: #{tpu_custom_call.1} parent=0 // pred_fallthru
    _
  %v23 = vld [vmem:[%s0] sm:$0xff]
  %v24 = vld [vmem:[%s0 + $0x8] sm:$0xff]
  %v25 = vld [vmem:[%s0 + $0x10] sm:$0xff]
  %v26 = vld [vmem:[%s0 + $0x18] sm:$0xff]
  %v27 = vld [vmem:[%s0 + $0x20] sm:$0xff]
  %v28 = vld [vmem:[%s0 + $0x28] sm:$0xff]
  %v29 = vld [vmem:[%s0 + $0x30] sm:$0xff]
  %v30 = vld [vmem:[%s0 + $0x38] sm:$0xff]
  %v31 = vld [vmem:[%s1] sm:$0xff]
  %v32 = vld [vmem:[%s1 + $0x8] sm:$0xff]
  %v33 = vld [vmem:[%s1 + $0x10] sm:$0xff]
  %v34 = vld [vmem:[%s1 + $0x18] sm:$0xff]
  %v35 = vld [vmem:[%s1 + $0x20] sm:$0xff]
  %v36 = vld [vmem:[%s1 + $0x28] sm:$0xff]
  %v37 = vld [vmem:[%s1 + $0x30] sm:$0xff]
  %v38 = vld [vmem:[%s1 + $0x38] sm:$0xff]
  %v39 = vld [vmem:[%s2] sm:$0xff]
  %v40 = vld [vmem:[%s2 + $0x8] sm:$0xff]
  %v41 = vld [vmem:[%s3] sm:$0xff]
  %v42 = vld [vmem:[%s3 + $0x8] sm:$0xff]
  %v43 = vld [vmem:[%s3 + $0x10] sm:$0xff]
  %v44 = vld [vmem:[%s3 + $0x18] sm:$0xff]
  %vm45 = vcmask 261120
  %v47 = vsel %vm45, %v31, 0
  %v50 = vsel %vm45, %v32, 0
  %v53 = vsel %vm45, %v33, 0
  %v56 = vsel %vm45, %v34, 0
  %v59 = vsel %vm45, %v35, 0
  %v62 = vsel %vm45, %v36, 0
  %v65 = vsel %vm45, %v37, 0
  %v68 = vsel %vm45, %v38, 0
  %70 = vmatprep.subr.mxu0 0.0
  %71 = vmatpush1.msra.mxu0 %v41
  %72 = vmatprep.subr.mxu0 0.0
  %73 = vmatpush1.msra.mxu0 %v42
  %74 = vmatprep.subr.mxu0 0.0
  %75 = vmatpush1.msra.mxu0 %v43
  %76 = vmatprep.subr.mxu0 0.0
  %77 = vmatpush1.msra.mxu0 %v44
  %78 = vmatprep.subr.mxu0 0.0
  %79 = vmatpush1.msra.mxu0 0.0
  %80 = vmatprep.subr.mxu0 0.0
  %81 = vmatpush1.msra.mxu0 0.0
  %82 = vmatprep.subr.mxu0 0.0
  %83 = vmatpush1.msra.mxu0 0.0
  %84 = vmatprep.subr.mxu0 0.0
  %85 = vmatpush1.msra.mxu0 0.0
  %86 = vmatprep.subr.mxu0 0.0
  %87 = vmatpush1.msra.mxu0 0.0
  %88 = vmatprep.subr.mxu0 0.0
  %89 = vmatpush1.msra.mxu0 0.0
  %90 = vmatprep.subr.mxu0 0.0
  %91 = vmatpush1.msra.mxu0 0.0
  %92 = vmatprep.subr.mxu0 0.0
  %93 = vmatpush1.msra.mxu0 0.0
  %94 = vmatprep.subr.mxu0 0.0
  %95 = vmatpush1.msra.mxu0 0.0
  %96 = vmatprep.subr.mxu0 0.0
  %97 = vmatpush1.msra.mxu0 0.0
  %98 = vmatprep.subr.mxu0 0.0
  %99 = vmatpush1.msra.mxu0 0.0
  %100 = vmatprep.subr.mxu0 0.0
  %101 = vmatpush1.msra.mxu0 0.0
  %102 = vmatprep.subr.mxu0 0.0
  %103 = vmatpush1.msra.mxu0 0.0
  %104 = vmatprep.subr.mxu0 0.0
  %105 = vmatpush1.msra.mxu0 0.0
  %106 = vmatprep.subr.mxu0 0.0
  %107 = vmatpush1.msra.mxu0 0.0
  %108 = vmatprep.subr.mxu0 0.0
  %109 = vmatpush1.msra.mxu0 0.0
  %110 = vmatprep.subr.mxu0 0.0
  %111 = vmatpush1.msra.mxu0 0.0
  %112 = vmatprep.subr.mxu0 0.0
  %113 = vmatpush1.msra.mxu0 0.0
  %114 = vmatprep.subr.mxu0 0.0
  %115 = vmatpush1.msra.mxu0 0.0
  %116 = vmatprep.subr.mxu0 0.0
  %117 = vmatpush1.msra.mxu0 0.0
  %118 = vmatprep.subr.mxu0 0.0
  %119 = vmatpush1.msra.mxu0 0.0
  %120 = vmatprep.subr.mxu0 0.0
  %121 = vmatpush1.msra.mxu0 0.0
  %122 = vmatprep.subr.mxu0 0.0
  %123 = vmatpush1.msra.mxu0 0.0
  %124 = vmatprep.subr.mxu0 0.0
  %125 = vmatpush1.msra.mxu0 0.0
  %126 = vmatprep.subr.mxu0 0.0
  %127 = vmatpush1.msra.mxu0 0.0
  %128 = vmatprep.subr.mxu0 0.0
  %129 = vmatpush1.msra.mxu0 0.0
  %130 = vmatprep.subr.mxu0 0.0
  %131 = vmatpush1.msra.mxu0 0.0
  %132 = vmatprep.subr.mxu0 0.0
  %133 = vmatpush1.msra.mxu0 0.0
  %134 = vmatprep.mubr.f32.mxu0 0.0
  %135 = vmatmul.mubr.f32.gmra.mrb[0].mxu0 %v47
  %v136 = vpop.f32.mrb[0].mxu0
  %v137 = vadd.f32 0.0, %v136
  %v138 = vpop.f32.mrb[0].mxu0
  %139 = vmatprep.mubr.f32.mxu0 0.0
  %140 = vmatmul.mubr.f32.gmra.mrb[0].mxu0 %v50
  %v141 = vpop.f32.mrb[0].mxu0
  %v142 = vadd.f32 0.0, %v141
  %v143 = vpop.f32.mrb[0].mxu0
  %144 = vmatprep.mubr.f32.mxu0 0.0
  %145 = vmatmul.mubr.f32.gmra.mrb[0].mxu0 %v53
  %v146 = vpop.f32.mrb[0].mxu0
  %v147 = vadd.f32 0.0, %v146
  %v148 = vpop.f32.mrb[0].mxu0
  %149 = vmatprep.mubr.f32.mxu0 0.0
  %150 = vmatmul.mubr.f32.gmra.mrb[0].mxu0 %v56
  %v151 = vpop.f32.mrb[0].mxu0
  %v152 = vadd.f32 0.0, %v151
  %v153 = vpop.f32.mrb[0].mxu0
  %154 = vmatprep.mubr.f32.mxu0 0.0
  %155 = vmatmul.mubr.f32.gmra.mrb[0].mxu0 %v59
  %v156 = vpop.f32.mrb[0].mxu0
  %v157 = vadd.f32 0.0, %v156
  %v158 = vpop.f32.mrb[0].mxu0
  %159 = vmatprep.mubr.f32.mxu0 0.0
  %160 = vmatmul.mubr.f32.gmra.mrb[0].mxu0 %v62
  %v161 = vpop.f32.mrb[0].mxu0
  %v162 = vadd.f32 0.0, %v161
  %v163 = vpop.f32.mrb[0].mxu0
  %164 = vmatprep.mubr.f32.mxu0 0.0
  %165 = vmatmul.mubr.f32.gmra.mrb[0].mxu0 %v65
  %v166 = vpop.f32.mrb[0].mxu0
  %v167 = vadd.f32 0.0, %v166
  %v168 = vpop.f32.mrb[0].mxu0
  %169 = vmatprep.mubr.f32.mxu0 0.0
  %170 = vmatmul.mubr.f32.gmra.mrb[0].mxu0 %v68
  %v171 = vpop.f32.mrb[0].mxu0
  %v172 = vadd.f32 0.0, %v171
  %v173 = vpop.f32.mrb[0].mxu0
  %174 = vdwg.mxu0
  %vm175 = vcmask 130048
  %v177 = vsel %vm175, %v23, 0
  %v180 = vsel %vm175, %v24, 0
  %v183 = vsel %vm175, %v25, 0
  %v186 = vsel %vm175, %v26, 0
  %v189 = vsel %vm175, %v27, 0
  %v192 = vsel %vm175, %v28, 0
  %v195 = vsel %vm175, %v29, 0
  %v198 = vsel %vm175, %v30, 0
  %200 = vmatprep.subr.mxu0 0.0
  %201 = vmatpush1.msra.mxu0 %v39
  %202 = vmatprep.subr.mxu0 0.0
  %203 = vmatpush1.msra.mxu0 %v40
  %204 = vmatprep.subr.mxu0 0.0
  %205 = vmatpush1.msra.mxu0 0.0
  %206 = vmatprep.subr.mxu0 0.0
  %207 = vmatpush1.msra.mxu0 0.0
  %208 = vmatprep.subr.mxu0 0.0
  %209 = vmatpush1.msra.mxu0 0.0
  %210 = vmatprep.subr.mxu0 0.0
  %211 = vmatpush1.msra.mxu0 0.0
  %212 = vmatprep.subr.mxu0 0.0
  %213 = vmatpush1.msra.mxu0 0.0
  %214 = vmatprep.subr.mxu0 0.0
  %215 = vmatpush1.msra.mxu0 0.0
  %216 = vmatprep.subr.mxu0 0.0
  %217 = vmatpush1.msra.mxu0 0.0
  %218 = vmatprep.subr.mxu0 0.0
  %219 = vmatpush1.msra.mxu0 0.0
  %220 = vmatprep.subr.mxu0 0.0
  %221 = vmatpush1.msra.mxu0 0.0
  %222 = vmatprep.subr.mxu0 0.0
  %223 = vmatpush1.msra.mxu0 0.0
  %224 = vmatprep.subr.mxu0 0.0
  %225 = vmatpush1.msra.mxu0 0.0
  %226 = vmatprep.subr.mxu0 0.0
  %227 = vmatpush1.msra.mxu0 0.0
  %228 = vmatprep.subr.mxu0 0.0
  %229 = vmatpush1.msra.mxu0 0.0
  %230 = vmatprep.subr.mxu0 0.0
  %231 = vmatpush1.msra.mxu0 0.0
  %232 = vmatprep.subr.mxu0 0.0
  %233 = vmatpush1.msra.mxu0 0.0
  %234 = vmatprep.subr.mxu0 0.0
  %235 = vmatpush1.msra.mxu0 0.0
  %236 = vmatprep.subr.mxu0 0.0
  %237 = vmatpush1.msra.mxu0 0.0
  %238 = vmatprep.subr.mxu0 0.0
  %239 = vmatpush1.msra.mxu0 0.0
  %240 = vmatprep.subr.mxu0 0.0
  %241 = vmatpush1.msra.mxu0 0.0
  %242 = vmatprep.subr.mxu0 0.0
  %243 = vmatpush1.msra.mxu0 0.0
  %244 = vmatprep.subr.mxu0 0.0
  %245 = vmatpush1.msra.mxu0 0.0
  %246 = vmatprep.subr.mxu0 0.0
  %247 = vmatpush1.msra.mxu0 0.0
  %248 = vmatprep.subr.mxu0 0.0
  %249 = vmatpush1.msra.mxu0 0.0
  %250 = vmatprep.subr.mxu0 0.0
  %251 = vmatpush1.msra.mxu0 0.0
  %252 = vmatprep.subr.mxu0 0.0
  %253 = vmatpush1.msra.mxu0 0.0
  %254 = vmatprep.subr.mxu0 0.0
  %255 = vmatpush1.msra.mxu0 0.0
  %256 = vmatprep.subr.mxu0 0.0
  %257 = vmatpush1.msra.mxu0 0.0
  %258 = vmatprep.subr.mxu0 0.0
  %259 = vmatpush1.msra.mxu0 0.0
  %260 = vmatprep.subr.mxu0 0.0
  %261 = vmatpush1.msra.mxu0 0.0
  %262 = vmatprep.subr.mxu0 0.0
  %263 = vmatpush1.msra.mxu0 0.0
  %264 = vmatprep.mubr.f32.mxu0 0.0
  %265 = vmatmul.mubr.f32.gmra.mrb[0].mxu0 %v177
  %v266 = vpop.f32.mrb[0].mxu0
  %v267 = vadd.f32 %v137, %v266
  %v268 = vpop.f32.mrb[0].mxu0
  %269 = vmatprep.mubr.f32.mxu0 0.0
  %270 = vmatmul.mubr.f32.gmra.mrb[0].mxu0 %v180
  %v271 = vpop.f32.mrb[0].mxu0
  %v272 = vadd.f32 %v142, %v271
  %v273 = vpop.f32.mrb[0].mxu0
  %274 = vmatprep.mubr.f32.mxu0 0.0
  %275 = vmatmul.mubr.f32.gmra.mrb[0].mxu0 %v183
  %v276 = vpop.f32.mrb[0].mxu0
  %v277 = vadd.f32 %v147, %v276
  %v278 = vpop.f32.mrb[0].mxu0
  %279 = vmatprep.mubr.f32.mxu0 0.0
  %280 = vmatmul.mubr.f32.gmra.mrb[0].mxu0 %v186
  %v281 = vpop.f32.mrb[0].mxu0
  %v282 = vadd.f32 %v152, %v281
  %v283 = vpop.f32.mrb[0].mxu0
  %284 = vmatprep.mubr.f32.mxu0 0.0
  %285 = vmatmul.mubr.f32.gmra.mrb[0].mxu0 %v189
  %v286 = vpop.f32.mrb[0].mxu0
  %v287 = vadd.f32 %v157, %v286
  %v288 = vpop.f32.mrb[0].mxu0
  %289 = vmatprep.mubr.f32.mxu0 0.0
  %290 = vmatmul.mubr.f32.gmra.mrb[0].mxu0 %v192
  %v291 = vpop.f32.mrb[0].mxu0
  %v292 = vadd.f32 %v162, %v291
  %v293 = vpop.f32.mrb[0].mxu0
  %294 = vmatprep.mubr.f32.mxu0 0.0
  %295 = vmatmul.mubr.f32.gmra.mrb[0].mxu0 %v195
  %v296 = vpop.f32.mrb[0].mxu0
  %v297 = vadd.f32 %v167, %v296
  %v298 = vpop.f32.mrb[0].mxu0
  %299 = vmatprep.mubr.f32.mxu0 0.0
  %300 = vmatmul.mubr.f32.gmra.mrb[0].mxu0 %v198
  %v301 = vpop.f32.mrb[0].mxu0
  %v302 = vadd.f32 %v172, %v301
  %v303 = vpop.f32.mrb[0].mxu0
  %304 = vdwg.mxu0
  %v305 = vld [vmem:[%s5] sm:$0x1]
  %v307 = vlaneseq
  %v308 = vshrl.u32 %v307, 7
  %v309 = vsub.s32 0, %v308
  %v310 = vrot.slane %v305, %v309
  %v312 = vadd.f32 %v267, %v310
  %v313 = vadd.f32 %v272, %v310
  %v314 = vadd.f32 %v277, %v310
  %v315 = vadd.f32 %v282, %v310
  %v316 = vadd.f32 %v287, %v310
  %v317 = vadd.f32 %v292, %v310
  %v318 = vadd.f32 %v297, %v310
  %v319 = vadd.f32 %v302, %v310
  %v320 = vxor.u32 %v312, 2147483648
  %v321 = vxor.u32 %v313, 2147483648
  %v322 = vxor.u32 %v314, 2147483648
  %v323 = vxor.u32 %v315, 2147483648
  %v324 = vxor.u32 %v316, 2147483648
  %v325 = vxor.u32 %v317, 2147483648
  %v326 = vxor.u32 %v318, 2147483648
  %v327 = vxor.u32 %v319, 2147483648
  %v328 = vmul.f32 %v320, 1.442695
  %v329 = vpow.pop %v328
  %v330 = vmul.f32 %v321, 1.442695
  %v331 = vpow.pop %v330
  %v332 = vmul.f32 %v322, 1.442695
  %v333 = vpow.pop %v332
  %v334 = vmul.f32 %v323, 1.442695
  %v335 = vpow.pop %v334
  %v336 = vmul.f32 %v324, 1.442695
  %v337 = vpow.pop %v336
  %v338 = vmul.f32 %v325, 1.442695
  %v339 = vpow.pop %v338
  %v340 = vmul.f32 %v326, 1.442695
  %v341 = vpow.pop %v340
  %v342 = vmul.f32 %v327, 1.442695
  %v343 = vpow.pop %v342
  %v344 = vadd.f32 %v329, 1.0
  %v345 = vadd.f32 %v331, 1.0
  %v346 = vadd.f32 %v333, 1.0
  %v347 = vadd.f32 %v335, 1.0
  %v348 = vadd.f32 %v337, 1.0
  %v349 = vadd.f32 %v339, 1.0
  %v350 = vadd.f32 %v341, 1.0
  %v351 = vadd.f32 %v343, 1.0
  %v352 = vrcp.pop %v344
  %v353 = vmul.f32 1.0, %v352
  %v354 = vrcp.pop %v345
  %v355 = vmul.f32 1.0, %v354
  %v356 = vrcp.pop %v346
  %v357 = vmul.f32 1.0, %v356
  %v358 = vrcp.pop %v347
  %v359 = vmul.f32 1.0, %v358
  %v360 = vrcp.pop %v348
  %v361 = vmul.f32 1.0, %v360
  %v362 = vrcp.pop %v349
  %v363 = vmul.f32 1.0, %v362
  %v364 = vrcp.pop %v350
  %v365 = vmul.f32 1.0, %v364
  %v366 = vrcp.pop %v351
  %v367 = vmul.f32 1.0, %v366
  %v368 = vmul.f32 %v353, %v31
  %v369 = vmul.f32 %v355, %v32
  %v370 = vmul.f32 %v357, %v33
  %v371 = vmul.f32 %v359, %v34
  %v372 = vmul.f32 %v361, %v35
  %v373 = vmul.f32 %v363, %v36
  %v374 = vmul.f32 %v365, %v37
  %v375 = vmul.f32 %v367, %v38
  %v376 = vld [vmem:[%s4] sm:$0xff]
  %v377 = vld [vmem:[%s4 + $0x8] sm:$0xff]
  %v378 = vld [vmem:[%s4 + $0x10] sm:$0xff]
  %v379 = vld [vmem:[%s4 + $0x18] sm:$0xff]
  %388 = vrot.lane.b32.xlu0 %v312, 64
  %v389 = vpop.permute.xlu0 %388
  %390 = vrot.lane.b32.xlu0 %v313, 64
  %v391 = vpop.permute.xlu0 %390
  %392 = vrot.lane.b32.xlu0 %v314, 64
  %v393 = vpop.permute.xlu0 %392
  %394 = vrot.lane.b32.xlu0 %v315, 64
  %v395 = vpop.permute.xlu0 %394
  %396 = vrot.lane.b32.xlu0 %v316, 64
  %v397 = vpop.permute.xlu0 %396
  %398 = vrot.lane.b32.xlu0 %v317, 64
  %v399 = vpop.permute.xlu0 %398
  %400 = vrot.lane.b32.xlu0 %v318, 64
  %v401 = vpop.permute.xlu0 %400
  %402 = vrot.lane.b32.xlu0 %v319, 64
  %v403 = vpop.permute.xlu0 %402
  %v413 = vsel %vm45, %v368, 0
  %v416 = vsel %vm45, %v369, 0
  %v419 = vsel %vm45, %v370, 0
  %v422 = vsel %vm45, %v371, 0
  %v425 = vsel %vm45, %v372, 0
  %v428 = vsel %vm45, %v373, 0
  %v431 = vsel %vm45, %v374, 0
  %v434 = vsel %vm45, %v375, 0
  %436 = vmatprep.subr.mxu0 0.0
  %437 = vmatpush1.msra.mxu0 %v376
  %438 = vmatprep.subr.mxu0 0.0
  %439 = vmatpush1.msra.mxu0 %v377
  %440 = vmatprep.subr.mxu0 0.0
  %441 = vmatpush1.msra.mxu0 %v378
  %442 = vmatprep.subr.mxu0 0.0
  %443 = vmatpush1.msra.mxu0 %v379
  %444 = vmatprep.subr.mxu0 0.0
  %445 = vmatpush1.msra.mxu0 0.0
  %446 = vmatprep.subr.mxu0 0.0
  %447 = vmatpush1.msra.mxu0 0.0
  %448 = vmatprep.subr.mxu0 0.0
  %449 = vmatpush1.msra.mxu0 0.0
  %450 = vmatprep.subr.mxu0 0.0
  %451 = vmatpush1.msra.mxu0 0.0
  %452 = vmatprep.subr.mxu0 0.0
  %453 = vmatpush1.msra.mxu0 0.0
  %454 = vmatprep.subr.mxu0 0.0
  %455 = vmatpush1.msra.mxu0 0.0
  %456 = vmatprep.subr.mxu0 0.0
  %457 = vmatpush1.msra.mxu0 0.0
  %458 = vmatprep.subr.mxu0 0.0
  %459 = vmatpush1.msra.mxu0 0.0
  %460 = vmatprep.subr.mxu0 0.0
  %461 = vmatpush1.msra.mxu0 0.0
  %462 = vmatprep.subr.mxu0 0.0
  %463 = vmatpush1.msra.mxu0 0.0
  %464 = vmatprep.subr.mxu0 0.0
  %465 = vmatpush1.msra.mxu0 0.0
  %466 = vmatprep.subr.mxu0 0.0
  %467 = vmatpush1.msra.mxu0 0.0
  %468 = vmatprep.subr.mxu0 0.0
  %469 = vmatpush1.msra.mxu0 0.0
  %470 = vmatprep.subr.mxu0 0.0
  %471 = vmatpush1.msra.mxu0 0.0
  %472 = vmatprep.subr.mxu0 0.0
  %473 = vmatpush1.msra.mxu0 0.0
  %474 = vmatprep.subr.mxu0 0.0
  %475 = vmatpush1.msra.mxu0 0.0
  %476 = vmatprep.subr.mxu0 0.0
  %477 = vmatpush1.msra.mxu0 0.0
  %478 = vmatprep.subr.mxu0 0.0
  %479 = vmatpush1.msra.mxu0 0.0
  %480 = vmatprep.subr.mxu0 0.0
  %481 = vmatpush1.msra.mxu0 0.0
  %482 = vmatprep.subr.mxu0 0.0
  %483 = vmatpush1.msra.mxu0 0.0
  %484 = vmatprep.subr.mxu0 0.0
  %485 = vmatpush1.msra.mxu0 0.0
  %486 = vmatprep.subr.mxu0 0.0
  %487 = vmatpush1.msra.mxu0 0.0
  %488 = vmatprep.subr.mxu0 0.0
  %489 = vmatpush1.msra.mxu0 0.0
  %490 = vmatprep.subr.mxu0 0.0
  %491 = vmatpush1.msra.mxu0 0.0
  %492 = vmatprep.subr.mxu0 0.0
  %493 = vmatpush1.msra.mxu0 0.0
  %494 = vmatprep.subr.mxu0 0.0
  %495 = vmatpush1.msra.mxu0 0.0
  %496 = vmatprep.subr.mxu0 0.0
  %497 = vmatpush1.msra.mxu0 0.0
  %498 = vmatprep.subr.mxu0 0.0
  %499 = vmatpush1.msra.mxu0 0.0
  %500 = vmatprep.mubr.f32.mxu0 0.0
  %501 = vmatmul.mubr.f32.gmra.mrb[0].mxu0 %v413
  %v502 = vpop.f32.mrb[0].mxu0
  %v503 = vadd.f32 %v389, %v502
  %v504 = vpop.f32.mrb[0].mxu0
  %505 = vmatprep.mubr.f32.mxu0 0.0
  %506 = vmatmul.mubr.f32.gmra.mrb[0].mxu0 %v416
  %v507 = vpop.f32.mrb[0].mxu0
  %v508 = vadd.f32 %v391, %v507
  %v509 = vpop.f32.mrb[0].mxu0
  %510 = vmatprep.mubr.f32.mxu0 0.0
  %511 = vmatmul.mubr.f32.gmra.mrb[0].mxu0 %v419
  %v512 = vpop.f32.mrb[0].mxu0
  %v513 = vadd.f32 %v393, %v512
  %v514 = vpop.f32.mrb[0].mxu0
  %515 = vmatprep.mubr.f32.mxu0 0.0
  %516 = vmatmul.mubr.f32.gmra.mrb[0].mxu0 %v422
  %v517 = vpop.f32.mrb[0].mxu0
  %v518 = vadd.f32 %v395, %v517
  %v519 = vpop.f32.mrb[0].mxu0
  %520 = vmatprep.mubr.f32.mxu0 0.0
  %521 = vmatmul.mubr.f32.gmra.mrb[0].mxu0 %v425
  %v522 = vpop.f32.mrb[0].mxu0
  %v523 = vadd.f32 %v397, %v522
  %v524 = vpop.f32.mrb[0].mxu0
  %525 = vmatprep.mubr.f32.mxu0 0.0
  %526 = vmatmul.mubr.f32.gmra.mrb[0].mxu0 %v428
  %v527 = vpop.f32.mrb[0].mxu0
  %v528 = vadd.f32 %v399, %v527
  %v529 = vpop.f32.mrb[0].mxu0
  %530 = vmatprep.mubr.f32.mxu0 0.0
  %531 = vmatmul.mubr.f32.gmra.mrb[0].mxu0 %v431
  %v532 = vpop.f32.mrb[0].mxu0
  %v533 = vadd.f32 %v401, %v532
  %v534 = vpop.f32.mrb[0].mxu0
  %535 = vmatprep.mubr.f32.mxu0 0.0
  %536 = vmatmul.mubr.f32.gmra.mrb[0].mxu0 %v434
  %v537 = vpop.f32.mrb[0].mxu0
  %v538 = vadd.f32 %v403, %v537
  %v539 = vpop.f32.mrb[0].mxu0
  %540 = vdwg.mxu0
  %v541 = vtanh.pop %v503
  %v542 = vtanh.pop %v508
  %v543 = vtanh.pop %v513
  %v544 = vtanh.pop %v518
  %v545 = vtanh.pop %v523
  %v546 = vtanh.pop %v528
  %v547 = vtanh.pop %v533
  %v548 = vtanh.pop %v538
  %v549 = vsub.f32 1.0, %v353
  %v550 = vsub.f32 1.0, %v355
  %v551 = vsub.f32 1.0, %v357
  %v552 = vsub.f32 1.0, %v359
  %v553 = vsub.f32 1.0, %v361
  %v554 = vsub.f32 1.0, %v363
  %v555 = vsub.f32 1.0, %v365
  %v556 = vsub.f32 1.0, %v367
  %557 = vrot.lane.b32.xlu0 %v31, 32
  %v558 = vpop.permute.xlu0 %557
  %559 = vrot.lane.b32.xlu0 %v32, 32
  %v560 = vpop.permute.xlu0 %559
  %561 = vrot.lane.b32.xlu0 %v33, 32
  %v562 = vpop.permute.xlu0 %561
  %563 = vrot.lane.b32.xlu0 %v34, 32
  %v564 = vpop.permute.xlu0 %563
  %565 = vrot.lane.b32.xlu0 %v35, 32
  %v566 = vpop.permute.xlu0 %565
  %567 = vrot.lane.b32.xlu0 %v36, 32
  %v568 = vpop.permute.xlu0 %567
  %569 = vrot.lane.b32.xlu0 %v37, 32
  %v570 = vpop.permute.xlu0 %569
  %571 = vrot.lane.b32.xlu0 %v38, 32
  %v572 = vpop.permute.xlu0 %571
  %v581 = vmul.f32 %v549, %v558
  %v582 = vmul.f32 %v550, %v560
  %v583 = vmul.f32 %v551, %v562
  %v584 = vmul.f32 %v552, %v564
  %v585 = vmul.f32 %v553, %v566
  %v586 = vmul.f32 %v554, %v568
  %v587 = vmul.f32 %v555, %v570
  %v588 = vmul.f32 %v556, %v572
  %597 = vrot.lane.b32.xlu0 %v541, 32
  %v598 = vpop.permute.xlu0 %597
  %599 = vrot.lane.b32.xlu0 %v542, 32
  %v600 = vpop.permute.xlu0 %599
  %601 = vrot.lane.b32.xlu0 %v543, 32
  %v602 = vpop.permute.xlu0 %601
  %603 = vrot.lane.b32.xlu0 %v544, 32
  %v604 = vpop.permute.xlu0 %603
  %605 = vrot.lane.b32.xlu0 %v545, 32
  %v606 = vpop.permute.xlu0 %605
  %607 = vrot.lane.b32.xlu0 %v546, 32
  %v608 = vpop.permute.xlu0 %607
  %609 = vrot.lane.b32.xlu0 %v547, 32
  %v610 = vpop.permute.xlu0 %609
  %611 = vrot.lane.b32.xlu0 %v548, 32
  %v612 = vpop.permute.xlu0 %611
  %v621 = vmul.f32 %v353, %v598
  %v622 = vmul.f32 %v355, %v600
  %v623 = vmul.f32 %v357, %v602
  %v624 = vmul.f32 %v359, %v604
  %v625 = vmul.f32 %v361, %v606
  %v626 = vmul.f32 %v363, %v608
  %v627 = vmul.f32 %v365, %v610
  %v628 = vmul.f32 %v367, %v612
  %v629 = vadd.f32 %v581, %v621
  %v630 = vadd.f32 %v582, %v622
  %v631 = vadd.f32 %v583, %v623
  %v632 = vadd.f32 %v584, %v624
  %v633 = vadd.f32 %v585, %v625
  %v634 = vadd.f32 %v586, %v626
  %v635 = vadd.f32 %v587, %v627
  %v636 = vadd.f32 %v588, %v628
  %645 = vrot.lane.b32.xlu0 %v629, 96
  %v646 = vpop.permute.xlu0 %645
  %647 = vrot.lane.b32.xlu0 %v630, 96
  %v648 = vpop.permute.xlu0 %647
  %649 = vrot.lane.b32.xlu0 %v631, 96
  %v650 = vpop.permute.xlu0 %649
  %651 = vrot.lane.b32.xlu0 %v632, 96
  %v652 = vpop.permute.xlu0 %651
  %653 = vrot.lane.b32.xlu0 %v633, 96
  %v654 = vpop.permute.xlu0 %653
  %655 = vrot.lane.b32.xlu0 %v634, 96
  %v656 = vpop.permute.xlu0 %655
  %657 = vrot.lane.b32.xlu0 %v635, 96
  %v658 = vpop.permute.xlu0 %657
  %659 = vrot.lane.b32.xlu0 %v636, 96
  %v660 = vpop.permute.xlu0 %659
  %669 = vst.msk [vmem:[%s6] sm:$0xff] %vm45, %v646
  %670 = vst.msk [vmem:[%s6 + $0x8] sm:$0xff] %vm45, %v648
  %671 = vst.msk [vmem:[%s6 + $0x10] sm:$0xff] %vm45, %v650
  %672 = vst.msk [vmem:[%s6 + $0x18] sm:$0xff] %vm45, %v652
  %673 = vst.msk [vmem:[%s6 + $0x20] sm:$0xff] %vm45, %v654
  %674 = vst.msk [vmem:[%s6 + $0x28] sm:$0xff] %vm45, %v656
  %675 = vst.msk [vmem:[%s6 + $0x30] sm:$0xff] %vm45, %v658
  %676 = vst.msk [vmem:[%s6 + $0x38] sm:$0xff] %vm45, %v660
  // Predicated region
  $region26: #{tpu_custom_call.1} parent=0 // pred_check
    _
  $region27: #{tpu_custom_call.1} parent=0 // pred_check_branch
    %678 = sbr.rel (0) target = $region29
  $region28: #{tpu_custom_call.1} parent=0 // pred_region
    _
  $region29: #{tpu_custom_call.1} parent=0 // pred_fallthru
    _
  // Predicated region
  $region30: #{tpu_custom_call.1} parent=0 // pred_check
    _
  $region31: #{tpu_custom_call.1} parent=0 // pred_check_branch
    %680 = sbr.rel (0) target = $region33
  $region32: #{tpu_custom_call.1} parent=0 // pred_region
    _
  $region33: #{tpu_custom_call.1} parent=0 // pred_fallthru
    _

</llo_original>
